<compile_context>
chip_gen: v7x
topology: tpu7x:2x2x1
jax: 0.10.0
libtpu: 0.0.40
codegen_flags: <defaults>
</compile_context>

<pallas_src>
import math

import jax
import jax.numpy as jnp
from jax.experimental import pallas as pl
from jax.experimental.pallas import tpu as pltpu


def _round_up(v, m):
    return ((v + m - 1) // m) * m


_MAX_RESIDENT_K = 2048   # keep the full dim in one K block up to this size


def _vmem_capacity_bytes():
    try:
        return int(pltpu.get_tpu_info().vmem_capacity_bytes)
    except Exception:
        return 128 * 1024 * 1024


def _default_tiles():
    """Generation-aware default (tm, tn)."""
    cap = _vmem_capacity_bytes()
    if cap <= 64 * 1024 * 1024:     # v7x-class: 64 MiB VMEM per TC, 2 TCs
        return 512, 1024
    return 1024, 1024               # v5e / v6e: 128 MiB VMEM


def _vmem_limit_bytes():
    cap = _vmem_capacity_bytes()
    return min(int(cap * 0.75), 96 * 1024 * 1024)


def _choose_tk(dim):
    """Reduction tile: whole dim if small, else a 128-aligned divisor."""
    if dim <= _MAX_RESIDENT_K:
        return dim
    for cand in (2048, 1024, 512, 256, 128):
        if dim % cand == 0:
            return cand
    # No aligned divisor: keep the whole dim resident (correct, VMEM-heavy).
    return dim


# ---------------------------------------------------------------------------
# Kernels
# ---------------------------------------------------------------------------

def _linear_kernel_noacc(x_ref, wt_ref, b_ref, o_ref):
    """K == 1 fast path: one MXU call per output tile, no accumulator."""
    x = x_ref[...].astype(wt_ref.dtype)          # in-kernel cast (VPU, cheap)
    y = jnp.dot(x, wt_ref[...], preferred_element_type=jnp.float32)
    o_ref[...] = (y + b_ref[...]).astype(o_ref.dtype)


def _linear_kernel_acc(x_ref, wt_ref, b_ref, o_ref, acc_ref):
    """K > 1 path: f32 accumulator scratch lives across the reduction axis."""
    k = pl.program_id(2)
    x = x_ref[...].astype(wt_ref.dtype)
    p = jnp.dot(x, wt_ref[...], preferred_element_type=jnp.float32)

    @pl.when(k == 0)
    def _():
        acc_ref[...] = p                         # store, not zero + add

    @pl.when(k > 0)
    def _():
        acc_ref[...] += p

    @pl.when(k == pl.num_programs(2) - 1)
    def _():
        o_ref[...] = (acc_ref[...] + b_ref[...]).astype(o_ref.dtype)


# ---------------------------------------------------------------------------
# Parameter prep (one-time, hoisted out of the hot path)
# ---------------------------------------------------------------------------

def prepare_linear_params(weight, bias, *, compute_dtype=None):
    """weight: (nc, dim) PyTorch nn.Linear layout; bias: (nc,).

    Returns:
      wt_padded: (dim, ncp)  transposed, lane-padded (ncp = round_up(nc, 128)),
                 optionally cast to compute_dtype (e.g. bf16 for the MXU path).
      b_padded : (1, ncp)    float32, zero-padded.
    """
    nc, dim = weight.shape
    ncp = _round_up(nc, 128)
    wt = jnp.asarray(weight).T                       # (dim, nc)
    if compute_dtype is not None:
        wt = wt.astype(compute_dtype)
    wt = jnp.pad(wt, ((0, 0), (0, ncp - nc)))
    b = jnp.pad(jnp.asarray(bias, jnp.float32), (0, ncp - nc)).reshape(1, ncp)
    return wt, b


# ---------------------------------------------------------------------------
# Forward
# ---------------------------------------------------------------------------

def classifier_linear(x, wt_padded, b_padded, nc, *, tm=None, tn=None, tk=None,
                      out_dtype=None, unpad_output=True):
    """y = x @ W.T + b using pre-prepared (transposed / lane-padded) params.

    x         : (M, dim)  any float dtype (cast to weight dtype inside kernel)
    wt_padded : (dim, ncp) from prepare_linear_params
    b_padded  : (1, ncp)   float32
    nc        : true number of classes
    Returns (M, nc) in out_dtype (default: x.dtype); set unpad_output=False to
    keep the lane-padded (M, ncp) result and avoid the final slice copy.
    """
    M, dim = x.shape
    dim_w, ncp = wt_padded.shape
    assert dim_w == dim, f"x feature dim {dim} != prepared weight dim {dim_w}"
    assert ncp % 128 == 0, "prepared weight must be lane-padded to 128"
    out_dtype = out_dtype or x.dtype

    tm_d, tn_d = _default_tiles()
    tm = tm or tm_d
    tn = tn or tn_d
    tm = max(8, (tm // 8) * 8)          # sublane-aligned
    tn = max(128, (tn // 128) * 128)    # lane-aligned

    # Ragged batch: pad only up to the next sublane multiple (<= 7 rows),
    # never up to a full row tile.  Row-partial tiles use a cdiv grid.
    Mp = _round_up(M, 8)
    if Mp != M:
        x = jnp.pad(x, ((0, Mp - M), (0, 0)))
    tm_eff = min(tm, Mp)
    grid_m = pl.cdiv(Mp, tm_eff)

    # Lane tile: multiple of 128 that divides the padded class count.
    tn_eff = math.gcd(ncp, min(tn, ncp))      # both multiples of 128 -> >= 128
    grid_n = ncp // tn_eff

    # Reduction tile.
    tk_eff = tk if (tk is not None and dim % tk == 0) else _choose_tk(dim)
    grid_k = 1 if tk_eff == dim else dim // tk_eff

    # v7x has 2 TensorCores: ensure >= 2 parallel (i, j) steps when splittable.
    if grid_m * grid_n < 2:
        half_n = tn_eff // 2
        half_m = (tm_eff // 2 // 8) * 8
        if half_n >= 128 and half_n % 128 == 0:
            tn_eff = half_n
            grid_n = ncp // tn_eff
        elif half_m >= 8:
            tm_eff = half_m
            grid_m = pl.cdiv(Mp, tm_eff)

    cost = pl.CostEstimate(
        flops=2 * Mp * dim * ncp,
        transcendentals=0,
        bytes_accessed=(x.size * x.dtype.itemsize
                        + wt_padded.size * wt_padded.dtype.itemsize
                        + ncp * 4
                        + Mp * ncp * jnp.dtype(out_dtype).itemsize),
    )

    if grid_k == 1:
        grid = (grid_m, grid_n)
        in_specs = [
            pl.BlockSpec((tm_eff, dim), lambda i, j: (i, 0)),     # x strip
            pl.BlockSpec((dim, tn_eff), lambda i, j: (0, j)),     # W^T tile
            pl.BlockSpec((1, tn_eff), lambda i, j: (0, j)),       # bias tile
        ]
        out_spec = pl.BlockSpec((tm_eff, tn_eff), lambda i, j: (i, j))
        scratch = []
        kernel = _linear_kernel_noacc
        dim_sem = ("parallel", "parallel")
    else:
        grid = (grid_m, grid_n, grid_k)
        in_specs = [
            pl.BlockSpec((tm_eff, tk_eff), lambda i, j, k: (i, k)),
            pl.BlockSpec((tk_eff, tn_eff), lambda i, j, k: (k, j)),
            pl.BlockSpec((1, tn_eff), lambda i, j, k: (0, j)),
        ]
        out_spec = pl.BlockSpec((tm_eff, tn_eff), lambda i, j, k: (i, j))
        scratch = [pltpu.VMEM((tm_eff, tn_eff), jnp.float32)]
        kernel = _linear_kernel_acc
        dim_sem = ("parallel", "parallel", "arbitrary")

    yp = pl.pallas_call(
        kernel,
        out_shape=jax.ShapeDtypeStruct((Mp, ncp), out_dtype),
        grid_spec=pltpu.PrefetchScalarGridSpec(
            num_scalar_prefetch=0,
            grid=grid,
            in_specs=in_specs,
            out_specs=out_spec,
            scratch_shapes=scratch,
        ),
        compiler_params=pltpu.CompilerParams(
            dimension_semantics=dim_sem,
            vmem_limit_bytes=_vmem_limit_bytes(),
        ),
        cost_estimate=cost,
    )(x, wt_padded, b_padded)

    if unpad_output:
        if Mp != M:
            yp = yp[:M]
        if ncp != nc:
            yp = yp[:, :nc]
    return yp


class ClassifierLinear:
    """Thin module-like wrapper mirroring Classifier_Linear.forward."""

    def __init__(self, weight, bias, *, compute_dtype=None):
        self.nc = weight.shape[0]
        self.wt, self.b = prepare_linear_params(weight, bias,
                                                compute_dtype=compute_dtype)

    def __call__(self, x, **kw):
        return classifier_linear(x, self.wt, self.b, self.nc, **kw)


if __name__ == "__main__":
    # Small shapes implied by the module: dim = feature size, nc = #classes.
    batch, dim, nc = 8, 32, 16

    key = jax.random.PRNGKey(0)
    kx, kw, kb = jax.random.split(key, 3)

    # nn.Linear-like uniform init.
    bound = 1.0 / math.sqrt(dim)
    weight = jax.random.uniform(kw, (nc, dim), jnp.float32, -bound, bound)
    bias = jax.random.uniform(kb, (nc,), jnp.float32, -bound, bound)
    x = jax.random.normal(kx, (batch, dim), jnp.float32)

    y_ref = x @ weight.T + bias

    # f32 path (tight numerical check).
    model = ClassifierLinear(weight, bias)
    y = model(x)
    y = jax.block_until_ready(y)
    assert y.shape == (batch, nc)
    assert jnp.allclose(y, y_ref, atol=1e-5, rtol=1e-5)

    # bf16 weight path (MXU fast path): x stays f32 in HBM and is cast to bf16
    # inside the kernel; accumulation is f32.  Looser tolerance.
    model_bf = ClassifierLinear(weight, bias, compute_dtype=jnp.bfloat16)
    y_bf = model_bf(x, out_dtype=jnp.float32)
    y_bf = jax.block_until_ready(y_bf)
    assert y_bf.shape == (batch, nc)
    assert jnp.allclose(y_bf, y_ref, atol=5e-2, rtol=5e-2)

    print("KERNEL_OK")
</pallas_src>

<mosaic_0001>
module attributes {stable_mosaic.version = 11 : i64} {
  func.func @_linear_kernel_noacc(%arg0: i32, %arg1: i32, %arg2: memref<8x32xf32, #tpu.memory_space<vmem>>, %arg3: memref<32x128xf32, #tpu.memory_space<vmem>>, %arg4: memref<1x128xf32, #tpu.memory_space<vmem>>, %arg5: memref<8x128xf32, #tpu.memory_space<vmem>>) attributes {dimension_semantics = [#tpu.dimension_semantics<parallel>, #tpu.dimension_semantics<parallel>], iteration_bounds = array<i64: 1, 1>, scalar_prefetch = 0 : i64, scratch_operands = 0 : i64, tpu.core_type = #tpu.core_type<tc>, window_params = [{transform_indices = @transform_0, window_bounds = array<i64: 8, 32>}, {transform_indices = @transform_1, window_bounds = array<i64: 32, 128>}, {transform_indices = @transform_2, window_bounds = array<i64: 1, 128>}, {transform_indices = @transform_3, window_bounds = array<i64: 8, 128>}]} {
    %c0 = arith.constant 0 : index
    %c0_0 = arith.constant 0 : index
    %0 = vector.load %arg2[%c0, %c0_0] : memref<8x32xf32, #tpu.memory_space<vmem>>, vector<8x32xf32>
    %c0_1 = arith.constant 0 : index
    %c0_2 = arith.constant 0 : index
    %1 = vector.load %arg3[%c0_1, %c0_2] : memref<32x128xf32, #tpu.memory_space<vmem>>, vector<32x128xf32>
    %cst = arith.constant dense<0.000000e+00> : vector<8x128xf32>
    %2 = tpu.matmul %0, %1, %cst {dimension_numbers = #tpu.dot_dimension_numbers<[1], [0], [0], [1], [0, 0, 1, 1], [], []>} : vector<8x32xf32>, vector<32x128xf32>, vector<8x128xf32> -> vector<8x128xf32>
    %c0_3 = arith.constant 0 : index
    %c0_4 = arith.constant 0 : index
    %3 = vector.load %arg4[%c0_3, %c0_4] : memref<1x128xf32, #tpu.memory_space<vmem>>, vector<1x128xf32>
    %4 = vector.broadcast %3 : vector<1x128xf32> to vector<8x128xf32>
    %5 = arith.addf %2, %4 : vector<8x128xf32>
    %c0_5 = arith.constant 0 : index
    %c0_6 = arith.constant 0 : index
    %6 = vector.load %arg5[%c0_5, %c0_6] : memref<8x128xf32, #tpu.memory_space<vmem>>, vector<8x128xf32>
    tpu.vector_store %arg5[%c0_5, %c0_6], %5 {strides = array<i32>} : memref<8x128xf32, #tpu.memory_space<vmem>>, vector<8x128xf32>,
    return
  }
  func.func @transform_0(%arg0: i32, %arg1: i32) -> (i32, i32) {
    %c0_i32 = arith.constant 0 : i32
    %c0_i32_0 = arith.constant 0 : i32
    return %arg0, %c0_i32 : i32, i32
  }
  func.func @transform_1(%arg0: i32, %arg1: i32) -> (i32, i32) {
    %c0_i32 = arith.constant 0 : i32
    %c0_i32_0 = arith.constant 0 : i32
    return %c0_i32, %arg1 : i32, i32
  }
  func.func @transform_2(%arg0: i32, %arg1: i32) -> (i32, i32) {
    %c0_i32 = arith.constant 0 : i32
    %c0_i32_0 = arith.constant 0 : i32
    return %c0_i32, %arg1 : i32, i32
  }
  func.func @transform_3(%arg0: i32, %arg1: i32) -> (i32, i32) {
    %c0_i32 = arith.constant 0 : i32
    return %arg0, %arg1 : i32, i32
  }
}

</mosaic_0001>

<llo_original>
// kernel: tpu_custom_call.1
$region0: #{tpu_custom_call.1}
  #allocation0 [shape = 'u32[]', space=smem, size = 0x4, offset = 0x4, fixed_abs, tag = 'smem constant byte address 0x4 - core index']
  #allocation1 [shape = 'u32[144,128]{1,0:T(1,128)}', space=vmem, size = 0x12000, scoped, tag = 'internal scratch']
  %s0 = inlined_call_operand.hbm [shape: f32[8,32], index: 0, kind: input, shape index: {}]
  %s1 = inlined_call_operand.hbm [shape: f32[32,128], index: 1, kind: input, shape index: {}]
  %s2 = inlined_call_operand.hbm [shape: f32[1,128], index: 2, kind: input, shape index: {}]
  %s3 = inlined_call_operand.hbm [shape: f32[8,128], index: 3, kind: output, shape index: {}]
  %s4 = sld [smem:[#allocation0]]
  $region34: #{tpu_custom_call.1} parent=0
    _
  %s6 = ssub.s32 1, %s4
  %s7 = scalar_select 0, %s6, %s4
  $region1: #{tpu_custom_call.1} parent=0
    #allocation2 [shape = 'u8[4096]{0}', space=vmem, size = 0x1000, scoped, tag = 'input window, operand 0, single buffered']
    #allocation3 [shape = 's32[1]{0}', space=sflag, size = 0x4, scoped, tag = 'scoped memory for tpu_custom_call.1']
    #allocation4 [shape = 's32[1]{0}', space=sflag, size = 0x4, scoped, tag = 'scoped memory for tpu_custom_call.1']
    #allocation5 [shape = 'u8[16384]{0}', space=vmem, size = 0x4000, scoped, tag = 'input window, operand 1, single buffered']
    #allocation6 [shape = 's32[1]{0}', space=sflag, size = 0x4, scoped, tag = 'scoped memory for tpu_custom_call.1']
    #allocation7 [shape = 'u8[512]{0}', space=vmem, size = 0x400, scoped, tag = 'input window, operand 2, single buffered']
    #allocation8 [shape = 'u8[4096]{0}', space=vmem, size = 0x1000, scoped, tag = 'output window, operand 0, single buffered']
    %8 = vsyncpa [#allocation3], 0
    %9 = vsyncpa [#allocation6], 0
    %10 = vsyncpa [#allocation4], 0
    // Predicated region
    $region2: #{tpu_custom_call.1} parent=1 // pred_check
      _
    $region3: #{tpu_custom_call.1} parent=1 // pred_check_branch
      %12 = sbr.rel (0) target = $region5
    $region4: #{tpu_custom_call.1} parent=1 // pred_region
      %s14 = ssub.s32 128, 128
      %15 = vsyncadd [#allocation3], %s14
      %s17 = sshll.u32 [#allocation2], 4
      %s18 = int_to_ptr.vmem [resolvable:$true] %s17
      %20 = dma.hbm_to_vmem [thread:$0]  %s0, 128, %s18, [#allocation3]
    $region5: #{tpu_custom_call.1} parent=1 // pred_fallthru
      _
    // Predicated region
    $region6: #{tpu_custom_call.1} parent=1 // pred_check
      _
    $region7: #{tpu_custom_call.1} parent=1 // pred_check_branch
      %22 = sbr.rel (0) target = $region9
    $region8: #{tpu_custom_call.1} parent=1 // pred_region
      %s24 = ssub.s32 512, 512
      %25 = vsyncadd [#allocation6], %s24
      %s26 = sshll.u32 [#allocation5], 4
      %s27 = int_to_ptr.vmem [resolvable:$true] %s26
      %32 = dma.hbm_to_vmem [thread:$0]  %s1, 512, %s27, [#allocation6], 128, 128, 8
    $region9: #{tpu_custom_call.1} parent=1 // pred_fallthru
      _
    // Predicated region
    $region10: #{tpu_custom_call.1} parent=1 // pred_check
      _
    $region11: #{tpu_custom_call.1} parent=1 // pred_check_branch
      %34 = sbr.rel (0) target = $region13
    $region12: #{tpu_custom_call.1} parent=1 // pred_region
      %s36 = ssub.s32 16, 16
      %37 = vsyncadd [#allocation6], %s36
      %s39 = sshll.u32 [#allocation7], 4
      %s40 = int_to_ptr.vmem [resolvable:$true] %s39
      %42 = dma.hbm_to_vmem [thread:$0]  %s2, 16, %s40, [#allocation6]
    $region13: #{tpu_custom_call.1} parent=1 // pred_fallthru
      _
    // Predicated region
    $region14: #{tpu_custom_call.1} parent=1 // pred_check
      _
    $region15: #{tpu_custom_call.1} parent=1 // pred_check_branch
      %44 = sbr.rel (0) target = $region17
    $region16: #{tpu_custom_call.1} parent=1 // pred_region
      %45 = dma.done [#allocation3], 128
    $region17: #{tpu_custom_call.1} parent=1 // pred_fallthru
      _
    // Predicated region
    $region18: #{tpu_custom_call.1} parent=1 // pred_check
      _
    $region19: #{tpu_custom_call.1} parent=1 // pred_check_branch
      %47 = sbr.rel (0) target = $region21
    $region20: #{tpu_custom_call.1} parent=1 // pred_region
      %48 = dma.done [#allocation6], 512
    $region21: #{tpu_custom_call.1} parent=1 // pred_fallthru
      _
    // Predicated region
    $region22: #{tpu_custom_call.1} parent=1 // pred_check
      _
    $region23: #{tpu_custom_call.1} parent=1 // pred_check_branch
      %50 = sbr.rel (0) target = $region25
    $region24: #{tpu_custom_call.1} parent=1 // pred_region
      %51 = dma.done [#allocation6], 16
    $region25: #{tpu_custom_call.1} parent=1 // pred_fallthru
      _
    %v52 = vld [vmem:[#allocation2] sm:$0xff]
    %v53 = vld [vmem:[#allocation5] sm:$0xff]
    %v54 = vld [vmem:[#allocation5 + $0x8] sm:$0xff]
    %v55 = vld [vmem:[#allocation5 + $0x10] sm:$0xff]
    %v56 = vld [vmem:[#allocation5 + $0x18] sm:$0xff]
    %v57 = vld [vmem:[#allocation7] sm:$0x1]
    %v59 = vlaneseq
    %v60 = vshrl.u32 %v59, 7
    %v61 = vsub.s32 0, %v60
    %v62 = vrot.slane %v57, %v61
    %vm64 = vcmask 261120
    %v66 = vsel %vm64, %v52, 0
    %68 = vmatprep.subr.mxu0 0.0
    %69 = vmatpush1.msra.mxu0 %v53
    %70 = vmatprep.subr.mxu0 0.0
    %71 = vmatpush1.msra.mxu0 %v54
    %72 = vmatprep.subr.mxu0 0.0
    %73 = vmatpush1.msra.mxu0 %v55
    %74 = vmatprep.subr.mxu0 0.0
    %75 = vmatpush1.msra.mxu0 %v56
    %76 = vmatprep.subr.mxu0 0.0
    %77 = vmatpush1.msra.mxu0 0.0
    %78 = vmatprep.subr.mxu0 0.0
    %79 = vmatpush1.msra.mxu0 0.0
    %80 = vmatprep.subr.mxu0 0.0
    %81 = vmatpush1.msra.mxu0 0.0
    %82 = vmatprep.subr.mxu0 0.0
    %83 = vmatpush1.msra.mxu0 0.0
    %84 = vmatprep.subr.mxu0 0.0
    %85 = vmatpush1.msra.mxu0 0.0
    %86 = vmatprep.subr.mxu0 0.0
    %87 = vmatpush1.msra.mxu0 0.0
    %88 = vmatprep.subr.mxu0 0.0
    %89 = vmatpush1.msra.mxu0 0.0
    %90 = vmatprep.subr.mxu0 0.0
    %91 = vmatpush1.msra.mxu0 0.0
    %92 = vmatprep.subr.mxu0 0.0
    %93 = vmatpush1.msra.mxu0 0.0
    %94 = vmatprep.subr.mxu0 0.0
    %95 = vmatpush1.msra.mxu0 0.0
    %96 = vmatprep.subr.mxu0 0.0
    %97 = vmatpush1.msra.mxu0 0.0
    %98 = vmatprep.subr.mxu0 0.0
    %99 = vmatpush1.msra.mxu0 0.0
    %100 = vmatprep.subr.mxu0 0.0
    %101 = vmatpush1.msra.mxu0 0.0
    %102 = vmatprep.subr.mxu0 0.0
    %103 = vmatpush1.msra.mxu0 0.0
    %104 = vmatprep.subr.mxu0 0.0
    %105 = vmatpush1.msra.mxu0 0.0
    %106 = vmatprep.subr.mxu0 0.0
    %107 = vmatpush1.msra.mxu0 0.0
    %108 = vmatprep.subr.mxu0 0.0
    %109 = vmatpush1.msra.mxu0 0.0
    %110 = vmatprep.subr.mxu0 0.0
    %111 = vmatpush1.msra.mxu0 0.0
    %112 = vmatprep.subr.mxu0 0.0
    %113 = vmatpush1.msra.mxu0 0.0
    %114 = vmatprep.subr.mxu0 0.0
    %115 = vmatpush1.msra.mxu0 0.0
    %116 = vmatprep.subr.mxu0 0.0
    %117 = vmatpush1.msra.mxu0 0.0
    %118 = vmatprep.subr.mxu0 0.0
    %119 = vmatpush1.msra.mxu0 0.0
    %120 = vmatprep.subr.mxu0 0.0
    %121 = vmatpush1.msra.mxu0 0.0
    %122 = vmatprep.subr.mxu0 0.0
    %123 = vmatpush1.msra.mxu0 0.0
    %124 = vmatprep.subr.mxu0 0.0
    %125 = vmatpush1.msra.mxu0 0.0
    %126 = vmatprep.subr.mxu0 0.0
    %127 = vmatpush1.msra.mxu0 0.0
    %128 = vmatprep.subr.mxu0 0.0
    %129 = vmatpush1.msra.mxu0 0.0
    %130 = vmatprep.subr.mxu0 0.0
    %131 = vmatpush1.msra.mxu0 0.0
    %132 = vmatprep.mubr.f32.mxu0 0.0
    %133 = vmatmul.mubr.f32.gmra.mrb[0].mxu0 %v66
    %v134 = vpop.f32.mrb[0].mxu0
    %v135 = vadd.f32 %v62, %v134
    %v136 = vpop.f32.mrb[0].mxu0
    %137 = vdwg.mxu0
    %138 = vst [vmem:[#allocation8] sm:$0xff] %v135
    // Predicated region
    $region26: #{tpu_custom_call.1} parent=1 // pred_check
      _
    $region27: #{tpu_custom_call.1} parent=1 // pred_check_branch
      %140 = sbr.rel (0) target = $region29
    $region28: #{tpu_custom_call.1} parent=1 // pred_region
      %s142 = ssub.s32 128, 128
      %143 = vsyncadd [#allocation4], %s142
      %s145 = sshll.u32 [#allocation8], 4
      %s146 = int_to_ptr.vmem [resolvable:$true] %s145
      %148 = dma.vmem_to_hbm [thread:$0]  %s146, 128, %s3, [#allocation4]
    $region29: #{tpu_custom_call.1} parent=1 // pred_fallthru
      _
    // Predicated region
    $region30: #{tpu_custom_call.1} parent=1 // pred_check
      _
    $region31: #{tpu_custom_call.1} parent=1 // pred_check_branch
      %150 = sbr.rel (0) target = $region33
    $region32: #{tpu_custom_call.1} parent=1 // pred_region
      %151 = dma.done [#allocation4], 128
    $region33: #{tpu_custom_call.1} parent=1 // pred_fallthru
      _
    %152 = vsyncpa [#allocation3], 1
    %153 = vsyncpa [#allocation6], 1
    %154 = vsyncpa [#allocation4], 1

</llo_original>
